<compile_context>
chip_gen: v7x
topology: tpu7x:2x2x1
jax: 0.10.0
libtpu: 0.0.40
codegen_flags: <defaults>
</compile_context>

<pallas_src>
import math

import jax
import jax.numpy as jnp
from jax import lax
from jax.experimental import pallas as pl
from jax.experimental.pallas import tpu as pltpu


def _round_up(x, m):
    return ((x + m - 1) // m) * m


_LANE = 128
_SUBLANE = 8
_DEFAULT_VMEM_BUDGET = 48 * 1024 * 1024   # safe on v7x (64 MiB VMEM), > scoped defaults


# ---------------------------------------------------------------------------
# Kernel 1: input projection  pre_x = x @ W_ih^T + (b_ih + b_hh)
# Fully parallel, pipelined, native-bf16 MXU matmul over all (time*batch) rows.
# ---------------------------------------------------------------------------
def _input_proj_kernel(x_ref, w_ref, b_ref, o_ref):
    # bf16 x bf16 -> f32 accumulation (native MXU rate); bias added in f32.
    o_ref[...] = (jnp.dot(x_ref[...], w_ref[...],
                          preferred_element_type=jnp.float32)
                  + b_ref[...]).astype(o_ref.dtype)


def input_projection(x2d, w_ih_t, bias, *, row_tile, vmem_limit):
    """x2d: (rows, d_in) bf16; w_ih_t: (d_in, H_pad) bf16; bias: (1, H_pad) f32."""
    m, d_in = x2d.shape
    h = w_ih_t.shape[1]
    assert m % row_tile == 0
    return pl.pallas_call(
        _input_proj_kernel,
        out_shape=jax.ShapeDtypeStruct((m, h), jnp.float32),
        grid_spec=pltpu.PrefetchScalarGridSpec(
            num_scalar_prefetch=0,
            grid=(m // row_tile,),
            in_specs=[
                pl.BlockSpec((row_tile, d_in), lambda i: (i, 0)),         # x rows
                # Grid-invariant weight/bias -> single buffer (no prefetch win).
                pl.BlockSpec((d_in, h), lambda i: (0, 0),
                             pipeline_mode=pl.Buffered(1)),               # W_ih^T
                pl.BlockSpec((1, h), lambda i: (0, 0),
                             pipeline_mode=pl.Buffered(1)),               # bias
            ],
            out_specs=pl.BlockSpec((row_tile, h), lambda i: (i, 0)),
        ),
        compiler_params=pltpu.CompilerParams(
            dimension_semantics=("parallel",),
            vmem_limit_bytes=vmem_limit),
    )(x2d, w_ih_t, bias)
    # TODO(synk): add an N (H_pad) / K (d_in) grid axis for very large layers.


# ---------------------------------------------------------------------------
# Kernel 2: masked recurrence over time.
# grid = (batch_tiles [parallel], time_chunks [arbitrary]); hidden state lives
# in VMEM scratch and is carried across time chunks.
# ---------------------------------------------------------------------------
def _masked_rnn_recurrent_kernel(prex_ref, m_ref, h0_ref, whh_ref,
                                 out_ref, hn_ref, h_scr):
    c = pl.program_id(1)

    @pl.when(c == 0)
    def _():
        h_scr[...] = h0_ref[...]

    whh = whh_ref[...]                      # (H_pad, H_pad) bf16, resident in VMEM
    t_chunk = prex_ref.shape[0]

    def step(i, h):
        # Serial critical path per step: one (b_tile,H_pad)x(H_pad,H_pad) bf16
        # MXU matmul (f32 acc) + tanh (EUP) + masked blend (VPU), h carried f32.
        pre = prex_ref[i] + jnp.dot(h.astype(jnp.bfloat16), whh,
                                    preferred_element_type=jnp.float32)
        h_new = jnp.tanh(pre)
        h = h + (h_new - h) * m_ref[i]      # (b_tile,1) mask broadcast over H
        out_ref[i] = h.astype(out_ref.dtype)
        return h

    # Partial unroll: LLO scheduling visibility without blowing vreg pressure.
    h_final = lax.fori_loop(0, t_chunk, step, h_scr[...],
                            unroll=min(8, t_chunk))
    h_scr[...] = h_final

    # h_n only needs the final value -> single store on the last time chunk.
    @pl.when(c == pl.num_programs(1) - 1)
    def _():
        hn_ref[...] = h_final.astype(hn_ref.dtype)


def _recurrence_vmem_bytes(t_chunk, b_tile, h_pad):
    """Conservative VMEM estimate (f32 output) used to size tiles per-chip."""
    prex = 2 * t_chunk * b_tile * h_pad * 4          # double-buffered input
    mask = 2 * t_chunk * b_tile * _LANE * 4          # trailing-1 dim pads to 128 lanes
    h0 = 2 * b_tile * h_pad * 4
    whh = 1 * h_pad * h_pad * 2                      # single-buffered bf16
    out = 2 * t_chunk * b_tile * h_pad * 4
    hn = 2 * b_tile * h_pad * 4
    scr = b_tile * h_pad * 4
    return prex + mask + h0 + whh + out + hn + scr


def masked_rnn_recurrence(pre_x, mask3, h0, w_hh_bf16, *, t_chunk, b_tile,
                          out_dtype, vmem_limit):
    """pre_x: (S_pad, B_pad, H_pad) f32;  mask3: (S_pad, B_pad, 1) f32;
    h0: (B_pad, H_pad) f32;  w_hh_bf16: (H_pad, H_pad) bf16 (pre-transposed)."""
    s_pad, b_pad, h_pad = pre_x.shape
    n_chunks = s_pad // t_chunk
    n_btiles = b_pad // b_tile
    out, hn = pl.pallas_call(
        _masked_rnn_recurrent_kernel,
        out_shape=(jax.ShapeDtypeStruct((s_pad, b_pad, h_pad), out_dtype),
                   jax.ShapeDtypeStruct((b_pad, h_pad), jnp.float32)),
        grid_spec=pltpu.PrefetchScalarGridSpec(
            num_scalar_prefetch=0,
            grid=(n_btiles, n_chunks),
            in_specs=[
                pl.BlockSpec((t_chunk, b_tile, h_pad), lambda b, c: (c, b, 0)),  # pre_x
                pl.BlockSpec((t_chunk, b_tile, 1),     lambda b, c: (c, b, 0)),  # mask
                pl.BlockSpec((b_tile, h_pad),          lambda b, c: (b, 0)),     # h0
                # W_hh^T never changes across the grid -> single buffer.
                pl.BlockSpec((h_pad, h_pad), lambda b, c: (0, 0),
                             pipeline_mode=pl.Buffered(1)),                      # W_hh^T
            ],
            out_specs=[
                pl.BlockSpec((t_chunk, b_tile, h_pad), lambda b, c: (c, b, 0)),  # output
                pl.BlockSpec((b_tile, h_pad),          lambda b, c: (b, 0)),     # h_n
            ],
            scratch_shapes=[pltpu.VMEM((b_tile, h_pad), jnp.float32)],
        ),
        compiler_params=pltpu.CompilerParams(
            dimension_semantics=("parallel", "arbitrary"),
            vmem_limit_bytes=vmem_limit),
    )(pre_x, mask3, h0, w_hh_bf16)
    return out, hn


# ---------------------------------------------------------------------------
# MaskedRNNBase-equivalent wrapper (forward only, tanh RNNCell, eval mode).
# ---------------------------------------------------------------------------
class MaskedRNN:
    def __init__(self, input_size, hidden_size, num_layers=1, key=None,
                 t_chunk=32, vmem_budget_bytes=_DEFAULT_VMEM_BUDGET):
        self.input_size = input_size
        self.hidden_size = hidden_size
        self.num_layers = num_layers
        self.t_chunk = t_chunk
        self.vmem_budget = vmem_budget_bytes
        self.h_pad = _round_up(hidden_size, _LANE)   # lane-dense stores
        key = jax.random.PRNGKey(0) if key is None else key
        bound = 1.0 / math.sqrt(hidden_size)         # PyTorch RNNCell init
        self.params_raw = []       # unpadded f32 weights (for the reference)
        self.params_kernel = []    # padded / transposed / bf16 weights for kernels
        for layer in range(num_layers):
            lin = input_size if layer == 0 else hidden_size
            key, k1, k2, k3, k4 = jax.random.split(key, 5)
            w_ih = jax.random.uniform(k1, (hidden_size, lin), jnp.float32, -bound, bound)
            w_hh = jax.random.uniform(k2, (hidden_size, hidden_size), jnp.float32, -bound, bound)
            b_ih = jax.random.uniform(k3, (hidden_size,), jnp.float32, -bound, bound)
            b_hh = jax.random.uniform(k4, (hidden_size,), jnp.float32, -bound, bound)
            self.params_raw.append((w_ih, w_hh, b_ih, b_hh))

            # NOTE: zero-padding of the extra rows/cols/lanes below is a
            # correctness invariant (padded H lanes stay exactly zero through
            # tanh and the W_hh matmul) -- do not replace with uninitialized
            # memory or a nonzero padded bias.
            lin_pad = lin if layer == 0 else self.h_pad
            w_ih_t = jnp.zeros((lin_pad, self.h_pad), jnp.float32)
            w_ih_t = w_ih_t.at[:lin, :hidden_size].set(w_ih.T)
            w_hh_t = jnp.zeros((self.h_pad, self.h_pad), jnp.float32)
            w_hh_t = w_hh_t.at[:hidden_size, :hidden_size].set(w_hh.T)
            bias = jnp.zeros((1, self.h_pad), jnp.float32)
            bias = bias.at[0, :hidden_size].set(b_ih + b_hh)
            self.params_kernel.append((w_ih_t.astype(jnp.bfloat16),
                                       w_hh_t.astype(jnp.bfloat16),
                                       bias))

    def _tile_sizes(self, S, B):
        H_pad = self.h_pad
        # Batch tile: as wide as possible (<= 128 sublanes).  A single batch
        # tile means the serial time recurrence runs exactly once.
        if B <= 128:
            B_pad = _round_up(B, _SUBLANE)
            b_tile = B_pad
        else:
            B_pad = _round_up(B, 128)
            b_tile = 128
        t_chunk = max(1, min(self.t_chunk, S))
        # Shrink tiles until the recurrence's VMEM residency fits the budget
        # (binding constraint on v7x's 64 MiB VMEM; also raises v5e/v6e's
        # 16/32 MiB scoped defaults via vmem_limit_bytes).
        while t_chunk > 1 and _recurrence_vmem_bytes(t_chunk, b_tile, H_pad) > self.vmem_budget:
            t_chunk = max(1, t_chunk // 2)
        if _recurrence_vmem_bytes(t_chunk, b_tile, H_pad) > self.vmem_budget and b_tile > _SUBLANE:
            b_tile = _SUBLANE          # always divides B_pad
        return B_pad, b_tile, t_chunk

    def __call__(self, inputs, mask=None, hx=None):
        # inputs: (S, B, input_size);  mask: (S, B) or None; hx: (L, B, H) or None
        S, B, _ = inputs.shape
        H, H_pad = self.hidden_size, self.h_pad
        B_pad, b_tile, t_chunk = self._tile_sizes(S, B)
        S_pad = _round_up(S, t_chunk)

        x = jnp.zeros((S_pad, B_pad, inputs.shape[-1]), jnp.float32)
        x = x.at[:S, :B, :].set(inputs.astype(jnp.float32))
        m3 = jnp.zeros((S_pad, B_pad, 1), jnp.float32)
        if mask is None:
            m3 = m3.at[:S, :B, 0].set(1.0)
        else:
            m3 = m3.at[:S, :B, 0].set(mask.astype(jnp.float32))
        hx_pad = jnp.zeros((self.num_layers, B_pad, H_pad), jnp.float32)
        if hx is not None:
            hx_pad = hx_pad.at[:, :B, :H].set(hx.astype(jnp.float32))

        # Projection row tile: largest divisor of the row count <= 512
        # (decoupled from t_chunk * B_pad).
        rows = S_pad * B_pad
        row_tile = rows
        for cand in (512, 256, 128, 64, 32, 16, 8):
            if rows % cand == 0:
                row_tile = cand
                break

        # Layer 0 input in bf16: native MXU dtype for the projection, half the
        # DMA bytes.  Subsequent layers already receive bf16 from the
        # recurrence output.
        layer_in = x.astype(jnp.bfloat16)
        h_n = []
        for layer in range(self.num_layers):
            w_ih_t, w_hh_bf16, bias = self.params_kernel[layer]
            d_in = layer_in.shape[-1]
            # (1) hoisted, fully-parallel input projection for the whole sequence
            x2d = layer_in.reshape(S_pad * B_pad, d_in)
            pre_x = input_projection(x2d, w_ih_t, bias, row_tile=row_tile,
                                     vmem_limit=self.vmem_budget)
            pre_x = pre_x.reshape(S_pad, B_pad, H_pad)
            # (2) serial masked recurrence (only h @ W_hh per step).
            # Inter-layer activations stored bf16; last layer f32 (user-facing).
            is_last = layer == self.num_layers - 1
            out_dtype = jnp.float32 if is_last else jnp.bfloat16
            out, hn = masked_rnn_recurrence(pre_x, m3, hx_pad[layer], w_hh_bf16,
                                            t_chunk=t_chunk, b_tile=b_tile,
                                            out_dtype=out_dtype,
                                            vmem_limit=self.vmem_budget)
            # NOTE: hn rows beyond B carry h0 (zeros) -- only [:B, :H] is valid.
            h_n.append(hn[:B, :H])
            layer_in = out
        output = layer_in[:S, :B, :H]
        return output, jnp.stack(h_n, axis=0)


# ---------------------------------------------------------------------------
# Pure-JAX reference mirroring the PyTorch MaskedRecurrent loop with the same
# precision budget as the kernels (bf16 matmul operands / inter-layer
# activations, f32 accumulation and carried hidden state).
# ---------------------------------------------------------------------------
def reference_forward(model, inputs, mask, hx=None):
    S, B, _ = inputs.shape
    if hx is None:
        hx = jnp.zeros((model.num_layers, B, model.hidden_size), jnp.float32)
    m3 = mask.reshape(S, B, 1).astype(jnp.float32)

    layer_in = inputs.astype(jnp.bfloat16)
    h_n = []
    out = None
    for layer in range(model.num_layers):
        w_ih, w_hh, b_ih, b_hh = model.params_raw[layer]
        w_ih_t = w_ih.T.astype(jnp.bfloat16)
        w_hh_t = w_hh.T.astype(jnp.bfloat16)
        bias = (b_ih + b_hh)[None, :]
        h = hx[layer]
        outs = []
        for t in range(S):
            pre = (jnp.dot(layer_in[t], w_ih_t,
                           preferred_element_type=jnp.float32) + bias
                   + jnp.dot(h.astype(jnp.bfloat16), w_hh_t,
                             preferred_element_type=jnp.float32))
            h_new = jnp.tanh(pre)
            h = h + (h_new - h) * m3[t]
            outs.append(h)
        out = jnp.stack(outs, axis=0)            # f32
        h_n.append(h)
        is_last = layer == model.num_layers - 1
        layer_in = out if is_last else out.astype(jnp.bfloat16)
    return out, jnp.stack(h_n, axis=0)


if __name__ == "__main__":
    SEQ, BATCH, IN, HID, LAYERS = 8, 2, 16, 32, 2

    key = jax.random.PRNGKey(0)
    k_x, k_m, k_p = jax.random.split(key, 3)

    x = jax.random.normal(k_x, (SEQ, BATCH, IN), jnp.float32)
    mask = (jax.random.uniform(k_m, (SEQ, BATCH)) > 0.3).astype(jnp.float32)
    mask = mask.at[0].set(1.0)   # first step unmasked for both sequences

    model = MaskedRNN(IN, HID, num_layers=LAYERS, key=k_p)

    output, hidden = model(x, mask)
    output = jax.block_until_ready(output)
    hidden = jax.block_until_ready(hidden)

    ref_out, ref_hid = reference_forward(model, x, mask)
    assert output.shape == (SEQ, BATCH, HID)
    assert hidden.shape == (LAYERS, BATCH, HID)
    # Tolerance covers bf16 matmul operands and bf16 storage of inter-layer
    # activations (both mirrored in the reference, but accumulation order and
    # rounding near bf16 ULP boundaries can differ slightly).
    assert jnp.allclose(output, ref_out, atol=5e-3, rtol=5e-3), \
        float(jnp.max(jnp.abs(output - ref_out)))
    assert jnp.allclose(hidden, ref_hid, atol=5e-3, rtol=5e-3), \
        float(jnp.max(jnp.abs(hidden - ref_hid)))

    print("KERNEL_OK")
</pallas_src>

<mosaic_0001>
module attributes {stable_mosaic.version = 11 : i64} {
  func.func @_input_proj_kernel(%arg0: i32, %arg1: memref<64x16xbf16, #tpu.memory_space<vmem>>, %arg2: memref<16x128xbf16, #tpu.memory_space<vmem>>, %arg3: memref<1x128xf32, #tpu.memory_space<vmem>>, %arg4: memref<64x128xf32, #tpu.memory_space<vmem>>) attributes {dimension_semantics = [#tpu.dimension_semantics<parallel>], iteration_bounds = array<i64: 1>, scalar_prefetch = 0 : i64, scratch_operands = 0 : i64, tpu.core_type = #tpu.core_type<tc>, window_params = [{transform_indices = @transform_0, window_bounds = array<i64: 64, 16>}, {pipeline_mode = #tpu.pipeline_mode<synchronous>, transform_indices = @transform_1, window_bounds = array<i64: 16, 128>}, {pipeline_mode = #tpu.pipeline_mode<synchronous>, transform_indices = @transform_2, window_bounds = array<i64: 1, 128>}, {transform_indices = @transform_3, window_bounds = array<i64: 64, 128>}]} {
    %c0 = arith.constant 0 : index
    %c0_0 = arith.constant 0 : index
    %0 = vector.load %arg1[%c0, %c0_0] : memref<64x16xbf16, #tpu.memory_space<vmem>>, vector<64x16xbf16>
    %c0_1 = arith.constant 0 : index
    %c0_2 = arith.constant 0 : index
    %1 = vector.load %arg2[%c0_1, %c0_2] : memref<16x128xbf16, #tpu.memory_space<vmem>>, vector<16x128xbf16>
    %cst = arith.constant dense<0.000000e+00> : vector<64x128xf32>
    %2 = tpu.matmul %0, %1, %cst {dimension_numbers = #tpu.dot_dimension_numbers<[1], [0], [0], [1], [0, 0, 1, 1], [], []>} : vector<64x16xbf16>, vector<16x128xbf16>, vector<64x128xf32> -> vector<64x128xf32>
    %c0_3 = arith.constant 0 : index
    %c0_4 = arith.constant 0 : index
    %3 = vector.load %arg3[%c0_3, %c0_4] : memref<1x128xf32, #tpu.memory_space<vmem>>, vector<1x128xf32>
    %4 = vector.broadcast %3 : vector<1x128xf32> to vector<64x128xf32>
    %5 = arith.addf %2, %4 : vector<64x128xf32>
    %c0_5 = arith.constant 0 : index
    %c0_6 = arith.constant 0 : index
    %6 = vector.load %arg4[%c0_5, %c0_6] : memref<64x128xf32, #tpu.memory_space<vmem>>, vector<64x128xf32>
    tpu.vector_store %arg4[%c0_5, %c0_6], %5 {strides = array<i32>} : memref<64x128xf32, #tpu.memory_space<vmem>>, vector<64x128xf32>,
    return
  }
  func.func @transform_0(%arg0: i32) -> (i32, i32) {
    %c0_i32 = arith.constant 0 : i32
    %c0_i32_0 = arith.constant 0 : i32
    return %arg0, %c0_i32 : i32, i32
  }
  func.func @transform_1(%arg0: i32) -> (i32, i32) {
    %c0_i32 = arith.constant 0 : i32
    %c0_i32_0 = arith.constant 0 : i32
    %c0_i32_1 = arith.constant 0 : i32
    return %c0_i32, %c0_i32_0 : i32, i32
  }
  func.func @transform_2(%arg0: i32) -> (i32, i32) {
    %c0_i32 = arith.constant 0 : i32
    %c0_i32_0 = arith.constant 0 : i32
    %c0_i32_1 = arith.constant 0 : i32
    return %c0_i32, %c0_i32_0 : i32, i32
  }
  func.func @transform_3(%arg0: i32) -> (i32, i32) {
    %c0_i32 = arith.constant 0 : i32
    %c0_i32_0 = arith.constant 0 : i32
    return %arg0, %c0_i32 : i32, i32
  }
}

</mosaic_0001>

<llo_original>
// kernel: tpu_custom_call.1
$region0: #{tpu_custom_call.1}
  #allocation0 [shape = 'u32[]', space=smem, size = 0x4, offset = 0x4, fixed_abs, tag = 'smem constant byte address 0x4 - core index']
  #allocation1 [shape = 'u32[144,128]{1,0:T(1,128)}', space=vmem, size = 0x12000, scoped, tag = 'internal scratch']
  %s0 = inlined_call_operand.vmem [shape: bf16[64,16], index: 0, kind: input, shape index: {}]
  %s1 = inlined_call_operand.vmem [shape: bf16[16,128], index: 1, kind: input, shape index: {}]
  %s2 = inlined_call_operand.vmem [shape: f32[1,128], index: 2, kind: input, shape index: {}]
  %s3 = inlined_call_operand.hbm [shape: f32[64,128], index: 3, kind: output, shape index: {}]
  %s4 = sld [smem:[#allocation0]]
  $region22: #{tpu_custom_call.1} parent=0
    _
  %s6 = ssub.s32 1, %s4
  %s7 = scalar_select 0, %s6, %s4
  $region1: #{tpu_custom_call.1} parent=0
    #allocation2 [shape = 'u8[32768]{0}', space=vmem, size = 0x8000, scoped, tag = 'output window, operand 0, single buffered']
    #allocation3 [shape = 's32[1]{0}', space=sflag, size = 0x4, scoped, tag = 'scoped memory for tpu_custom_call.1']
    %8 = vsyncpa [#allocation3], 0
    // Predicated region
    $region2: #{tpu_custom_call.1} parent=1 // pred_check
      _
    $region3: #{tpu_custom_call.1} parent=1 // pred_check_branch
      %10 = sbr.rel (0) target = $region5
    $region4: #{tpu_custom_call.1} parent=1 // pred_region
      _
    $region5: #{tpu_custom_call.1} parent=1 // pred_fallthru
      _
    // Predicated region
    $region6: #{tpu_custom_call.1} parent=1 // pred_check
      _
    $region7: #{tpu_custom_call.1} parent=1 // pred_check_branch
      %12 = sbr.rel (0) target = $region9
    $region8: #{tpu_custom_call.1} parent=1 // pred_region
      _
    $region9: #{tpu_custom_call.1} parent=1 // pred_fallthru
      _
    // Predicated region
    $region10: #{tpu_custom_call.1} parent=1 // pred_check
      _
    $region11: #{tpu_custom_call.1} parent=1 // pred_check_branch
      %14 = sbr.rel (0) target = $region13
    $region12: #{tpu_custom_call.1} parent=1 // pred_region
      _
    $region13: #{tpu_custom_call.1} parent=1 // pred_fallthru
      _
    %v16 = vld [vmem:[%s0] sm:$0xf]
    %v17 = vld [vmem:[%s0 + $0x4] sm:$0xf]
    %v18 = vld [vmem:[%s0 + $0x8] sm:$0xf]
    %v19 = vld [vmem:[%s0 + $0xc] sm:$0xf]
    %v20 = vld [vmem:[%s0 + $0x10] sm:$0xf]
    %v21 = vld [vmem:[%s0 + $0x14] sm:$0xf]
    %v22 = vld [vmem:[%s0 + $0x18] sm:$0xf]
    %v23 = vld [vmem:[%s0 + $0x1c] sm:$0xf]
    %v24 = vld [vmem:[%s1] sm:$0xf]
    %v25 = vld [vmem:[%s1 + $0x4] sm:$0xf]
    %v26 = vld [vmem:[%s2] sm:$0x1]
    %v28 = vlaneseq
    %v29 = vshrl.u32 %v28, 7
    %v30 = vsub.s32 0, %v29
    %v31 = vrot.slane %v26, %v30
    %v41 = vunpack.c.l.b16 %v16
    %v42 = vunpack.c.l.b16 %v17
    %v43 = vunpack.c.l.b16 %v18
    %v44 = vunpack.c.l.b16 %v19
    %v45 = vunpack.c.l.b16 %v20
    %v46 = vunpack.c.l.b16 %v21
    %v47 = vunpack.c.l.b16 %v22
    %v48 = vunpack.c.l.b16 %v23
    %v49 = vpack.c.b16 %v42, %v41
    %v50 = vpack.c.b16 %v44, %v43
    %v51 = vpack.c.b16 %v46, %v45
    %v52 = vpack.c.b16 %v48, %v47
    %v55 = vunpack.c.l.b16 %v24
    %v56 = vunpack.c.l.b16 %v25
    %v57 = vpack.c.b16 %v56, %v55
    %vm59 = vcmask 130048
    %v61 = vsel %vm59, %v49, 0
    %v64 = vsel %vm59, %v50, 0
    %v67 = vsel %vm59, %v51, 0
    %v70 = vsel %vm59, %v52, 0
    %72 = vmatprep.subr.bf16.mxu0 0
    %73 = vmatpush1.bf16.msra.mxu0 %v57
    %74 = vmatprep.subr.bf16.mxu0 0
    %75 = vmatpush1.bf16.msra.mxu0 0
    %76 = vmatprep.subr.bf16.mxu0 0
    %77 = vmatpush1.bf16.msra.mxu0 0
    %78 = vmatprep.subr.bf16.mxu0 0
    %79 = vmatpush1.bf16.msra.mxu0 0
    %80 = vmatprep.subr.bf16.mxu0 0
    %81 = vmatpush1.bf16.msra.mxu0 0
    %82 = vmatprep.subr.bf16.mxu0 0
    %83 = vmatpush1.bf16.msra.mxu0 0
    %84 = vmatprep.subr.bf16.mxu0 0
    %85 = vmatpush1.bf16.msra.mxu0 0
    %86 = vmatprep.subr.bf16.mxu0 0
    %87 = vmatpush1.bf16.msra.mxu0 0
    %88 = vmatprep.subr.bf16.mxu0 0
    %89 = vmatpush1.bf16.msra.mxu0 0
    %90 = vmatprep.subr.bf16.mxu0 0
    %91 = vmatpush1.bf16.msra.mxu0 0
    %92 = vmatprep.subr.bf16.mxu0 0
    %93 = vmatpush1.bf16.msra.mxu0 0
    %94 = vmatprep.subr.bf16.mxu0 0
    %95 = vmatpush1.bf16.msra.mxu0 0
    %96 = vmatprep.subr.bf16.mxu0 0
    %97 = vmatpush1.bf16.msra.mxu0 0
    %98 = vmatprep.subr.bf16.mxu0 0
    %99 = vmatpush1.bf16.msra.mxu0 0
    %100 = vmatprep.subr.bf16.mxu0 0
    %101 = vmatpush1.bf16.msra.mxu0 0
    %102 = vmatprep.subr.bf16.mxu0 0
    %103 = vmatpush1.bf16.msra.mxu0 0
    %104 = vmatprep.mubr.bf16.mxu0 0
    %105 = vmatmul.mubr.bf16.gmra.mrb[0].mxu0 %v61
    %v106 = vpop.f32.mrb[0].mxu0
    %v107 = vadd.f32 %v31, %v106
    %v108 = vpop.f32.mrb[0].mxu0
    %v109 = vpop.f32.mrb[0].mxu0
    %v110 = vadd.f32 %v31, %v109
    %v111 = vpop.f32.mrb[0].mxu0
    %112 = vmatprep.mubr.bf16.mxu0 0
    %113 = vmatmul.mubr.bf16.gmra.mrb[0].mxu0 %v64
    %v114 = vpop.f32.mrb[0].mxu0
    %v115 = vadd.f32 %v31, %v114
    %v116 = vpop.f32.mrb[0].mxu0
    %v117 = vpop.f32.mrb[0].mxu0
    %v118 = vadd.f32 %v31, %v117
    %v119 = vpop.f32.mrb[0].mxu0
    %120 = vmatprep.mubr.bf16.mxu0 0
    %121 = vmatmul.mubr.bf16.gmra.mrb[0].mxu0 %v67
    %v122 = vpop.f32.mrb[0].mxu0
    %v123 = vadd.f32 %v31, %v122
    %v124 = vpop.f32.mrb[0].mxu0
    %v125 = vpop.f32.mrb[0].mxu0
    %v126 = vadd.f32 %v31, %v125
    %v127 = vpop.f32.mrb[0].mxu0
    %128 = vmatprep.mubr.bf16.mxu0 0
    %129 = vmatmul.mubr.bf16.gmra.mrb[0].mxu0 %v70
    %v130 = vpop.f32.mrb[0].mxu0
    %v131 = vadd.f32 %v31, %v130
    %v132 = vpop.f32.mrb[0].mxu0
    %v133 = vpop.f32.mrb[0].mxu0
    %v134 = vadd.f32 %v31, %v133
    %v135 = vpop.f32.mrb[0].mxu0
    %136 = vdwg.mxu0
    %137 = vst [vmem:[#allocation2] sm:$0xff] %v107
    %138 = vst [vmem:[#allocation2 + $0x8] sm:$0xff] %v110
    %139 = vst [vmem:[#allocation2 + $0x10] sm:$0xff] %v115
    %140 = vst [vmem:[#allocation2 + $0x18] sm:$0xff] %v118
    %141 = vst [vmem:[#allocation2 + $0x20] sm:$0xff] %v123
    %142 = vst [vmem:[#allocation2 + $0x28] sm:$0xff] %v126
    %143 = vst [vmem:[#allocation2 + $0x30] sm:$0xff] %v131
    %144 = vst [vmem:[#allocation2 + $0x38] sm:$0xff] %v134
    // Predicated region
    $region14: #{tpu_custom_call.1} parent=1 // pred_check
      _
    $region15: #{tpu_custom_call.1} parent=1 // pred_check_branch
      %146 = sbr.rel (0) target = $region17
    $region16: #{tpu_custom_call.1} parent=1 // pred_region
      %s148 = ssub.s32 1024, 1024
      %149 = vsyncadd [#allocation3], %s148
      %s150 = sshll.u32 [#allocation2], 4
      %s151 = int_to_ptr.vmem [resolvable:$true] %s150
      %156 = dma.vmem_to_hbm [thread:$0]  %s151, 1024, %s3, [#allocation3], 128, 128, 8
    $region17: #{tpu_custom_call.1} parent=1 // pred_fallthru
      _
    // Predicated region
    $region18: #{tpu_custom_call.1} parent=1 // pred_check
      _
    $region19: #{tpu_custom_call.1} parent=1 // pred_check_branch
      %158 = sbr.rel (0) target = $region21
    $region20: #{tpu_custom_call.1} parent=1 // pred_region
      %159 = dma.done [#allocation3], 1024
    $region21: #{tpu_custom_call.1} parent=1 // pred_fallthru
      _
    %160 = vsyncpa [#allocation3], 1

</llo_original>
